<compile_context>
chip_gen: v5e
topology: v5e:2x2
jax: 0.10.0
libtpu: 0.0.40
codegen_flags: <defaults>
</compile_context>

<pallas_src>
import functools

import jax
import jax.numpy as jnp
from jax import lax
from jax.experimental import pallas as pl
from jax.experimental.pallas import tpu as pltpu


def _contrastive_loss_kernel(feat_ref, lab_col_ref, lab_row_ref, out_ref, *, temperature):
    feat = feat_ref[...].astype(jnp.float32)            # (B, D)
    lab_col = lab_col_ref[...]                          # (B, 1) int32
    lab_row = lab_row_ref[...]                          # (1, B) int32
    B = feat.shape[0]

    inf = jnp.float32(jnp.inf)

    # Fused input-finiteness gate: one pass over the tile already resident in vregs.
    # (abs(x) < inf) is False for both NaN and +/-Inf.
    finite_flag = jnp.min((jnp.abs(feat) < inf).astype(jnp.float32),
                          axis=(0, 1), keepdims=True)   # (1,1); 1.0 iff all finite

    # F.normalize(p=2, dim=1): x / max(||x||_2, 1e-12), done as one broadcast multiply.
    feat_sq = jnp.sum(feat * feat, axis=1, keepdims=True)        # (B, 1)
    inv_norm = 1.0 / jnp.maximum(jnp.sqrt(feat_sq), 1e-12)       # (B, 1)
    fn = feat * inv_norm                                         # (B, D)
    # NOTE: the reference's nan_to_num on `fn` is a no-op for finite inputs, and
    # non-finite inputs already force loss=0 via finite_flag, so it is elided.

    # Cosine-similarity gram matrix on the MXU: fn @ fn.T (NT contraction).
    gram = lax.dot_general(fn, fn, (((1,), (1,)), ((), ())),
                           preferred_element_type=jnp.float32,
                           precision=lax.Precision.HIGHEST)      # (B, B)

    sim = jnp.clip(gram * (1.0 / temperature), -30.0, 30.0)      # (B, B)

    # Positive-pair mask: same label, excluding self-pairs.
    same = (lab_col == lab_row).astype(jnp.float32)              # (B, B)
    row_ids = lax.broadcasted_iota(jnp.int32, (B, B), 0)
    col_ids = lax.broadcasted_iota(jnp.int32, (B, B), 1)
    is_diag = row_ids == col_ids
    mask = jnp.where(is_diag, 0.0, same)                         # (B, B)

    exp_logits = jnp.exp(sim)                                    # (B, B)
    row_sum = jnp.sum(exp_logits, axis=1, keepdims=True)         # (B, 1)
    diag_exp = jnp.sum(jnp.where(is_diag, exp_logits, 0.0),
                       axis=1, keepdims=True)                    # (B, 1)
    log_prob = sim - jnp.log(row_sum - diag_exp + 1e-8)          # (B, B)

    mask_sum = jnp.sum(mask, axis=1, keepdims=True)              # (B, 1)
    mean_log_prob_pos = (jnp.sum(mask * log_prob, axis=1, keepdims=True)
                         / (mask_sum + 1e-8))                    # (B, 1)

    # Mean over rows that have at least one positive.
    valid = (mask_sum > 0.0).astype(jnp.float32)                 # (B, 1)
    num_valid = jnp.sum(valid, axis=(0, 1), keepdims=True)       # (1, 1)
    sum_valid = jnp.sum(valid * mean_log_prob_pos,
                        axis=(0, 1), keepdims=True)              # (1, 1)

    loss = jnp.where(num_valid > 0.0,
                     -sum_valid / jnp.maximum(num_valid, 1.0),
                     jnp.zeros_like(sum_valid))                  # (1, 1)

    # Final NaN/Inf guard + non-finite-input guard, fused in-kernel.
    ok = (finite_flag > 0.5) & (jnp.abs(loss) < inf)
    out_ref[...] = jnp.where(ok, loss, jnp.zeros_like(loss))


def contrastive_loss(features, labels, *, temperature=0.1):
    """features: [B, D] float, labels: [B] int. Returns scalar f32 loss."""
    B, _ = features.shape
    if B < 2:   # static early-return guard from the module
        return jnp.float32(0.0)

    lab = labels.astype(jnp.int32)
    lab_col = lab.reshape(B, 1)
    lab_row = lab.reshape(1, B)

    kernel = functools.partial(_contrastive_loss_kernel, temperature=float(temperature))

    out = pl.pallas_call(
        kernel,
        out_shape=jax.ShapeDtypeStruct((1, 1), jnp.float32),
        in_specs=[pl.BlockSpec(memory_space=pltpu.MemorySpace.VMEM)] * 3,
        out_specs=pl.BlockSpec(memory_space=pltpu.MemorySpace.VMEM),
    )(features, lab_col, lab_row)

    return out[0, 0]


def _reference_loss(features, labels, temperature=0.1):
    """Pure-JAX reference mirroring the PyTorch forward (for correctness check)."""
    B = features.shape[0]
    finite = jnp.all(jnp.isfinite(features))
    fn = features / jnp.maximum(jnp.linalg.norm(features, axis=1, keepdims=True), 1e-12)
    fn = jnp.where(jnp.isnan(fn), 0.0, fn)
    sim = jnp.matmul(fn, fn.T, precision=lax.Precision.HIGHEST) / temperature
    sim = jnp.clip(sim, -30.0, 30.0)
    mask = (labels[:, None] == labels[None, :]).astype(jnp.float32) - jnp.eye(B, dtype=jnp.float32)
    exp_logits = jnp.exp(sim)
    denom = exp_logits.sum(axis=1, keepdims=True) - jnp.diag(exp_logits)[:, None] + 1e-8
    log_prob = sim - jnp.log(denom)
    mask_sum = mask.sum(axis=1)
    mean_log_prob_pos = (mask * log_prob).sum(axis=1) / (mask_sum + 1e-8)
    valid = mask_sum > 0
    num_valid = jnp.sum(valid)
    loss = jnp.where(
        num_valid > 0,
        -jnp.sum(jnp.where(valid, mean_log_prob_pos, 0.0)) /
        jnp.maximum(num_valid, 1).astype(jnp.float32),
        0.0)
    loss = jnp.where(finite & jnp.isfinite(loss), loss, 0.0)
    return jnp.float32(loss)


if __name__ == "__main__":
    key = jax.random.PRNGKey(0)
    k_feat, k_lab = jax.random.split(key)

    B, D = 8, 128
    features = jax.random.normal(k_feat, (B, D), dtype=jnp.float32)
    # Few classes so same-class positive pairs exist.
    labels = jax.random.randint(k_lab, (B,), 0, 3, dtype=jnp.int32)

    loss = contrastive_loss(features, labels, temperature=0.1)
    loss = jax.block_until_ready(loss)

    ref = _reference_loss(features, labels, temperature=0.1)
    assert jnp.allclose(loss, ref, rtol=1e-4, atol=1e-4), (loss, ref)

    print("KERNEL_OK")
</pallas_src>

<mosaic_0001>
module attributes {stable_mosaic.version = 11 : i64} {
  func.func @_contrastive_loss_kernel(%arg0: memref<8x128xf32, #tpu.memory_space<vmem>>, %arg1: memref<8x1xi32, #tpu.memory_space<vmem>>, %arg2: memref<1x8xi32, #tpu.memory_space<vmem>>, %arg3: memref<1x1xf32, #tpu.memory_space<vmem>>) attributes {dimension_semantics = [], scalar_prefetch = 0 : i64, scratch_operands = 0 : i64, tpu.core_type = #tpu.core_type<tc>} {
    %c0 = arith.constant 0 : index
    %c0_0 = arith.constant 0 : index
    %0 = vector.load %arg0[%c0, %c0_0] : memref<8x128xf32, #tpu.memory_space<vmem>>, vector<8x128xf32>
    %c0_1 = arith.constant 0 : index
    %c0_2 = arith.constant 0 : index
    %1 = vector.load %arg1[%c0_1, %c0_2] : memref<8x1xi32, #tpu.memory_space<vmem>>, vector<8x1xi32>
    %c0_3 = arith.constant 0 : index
    %c0_4 = arith.constant 0 : index
    %2 = vector.load %arg2[%c0_3, %c0_4] : memref<1x8xi32, #tpu.memory_space<vmem>>, vector<1x8xi32>
    %3 = math.absf %0 : vector<8x128xf32>
    %cst = arith.constant 0x7F800000 : f32
    %4 = vector.broadcast %cst : f32 to vector<8x128xf32>
    %5 = arith.cmpf olt, %3, %4 : vector<8x128xf32>
    %6 = arith.extui %5 : vector<8x128xi1> to vector<8x128xi32>
    %7 = arith.sitofp %6 : vector<8x128xi32> to vector<8x128xf32>
    %8 = vector.shape_cast %7 : vector<8x128xf32> to vector<1x8x128xf32>
    %cst_5 = arith.constant dense<0x7F800000> : vector<1xf32>
    %9 = vector.multi_reduction <minimumf>, %8, %cst_5 [1, 2] : vector<1x8x128xf32> to vector<1xf32>
    %10 = vector.shape_cast %9 : vector<1xf32> to vector<1x1x1xf32>
    %11 = vector.extract %10[0, 0, 0] : f32 from vector<1x1x1xf32>
    %12 = vector.broadcast %11 : f32 to vector<1x1xf32>
    %13 = arith.mulf %0, %0 : vector<8x128xf32>
    %cst_6 = arith.constant dense<0.000000e+00> : vector<8xf32>
    %14 = vector.multi_reduction <add>, %13, %cst_6 [1] : vector<8x128xf32> to vector<8xf32>
    %15 = vector.shape_cast %14 : vector<8xf32> to vector<8x1xf32>
    %16 = math.sqrt %15 : vector<8x1xf32>
    %cst_7 = arith.constant 9.99999996E-13 : f32
    %17 = vector.broadcast %cst_7 : f32 to vector<8x1xf32>
    %18 = arith.maximumf %16, %17 : vector<8x1xf32>
    %cst_8 = arith.constant 1.000000e+00 : f32
    %19 = vector.broadcast %cst_8 : f32 to vector<8x1xf32>
    %20 = arith.divf %19, %18 : vector<8x1xf32>
    %21 = vector.broadcast %20 : vector<8x1xf32> to vector<8x128xf32>
    %22 = arith.mulf %0, %21 : vector<8x128xf32>
    %cst_9 = arith.constant dense<0.000000e+00> : vector<8x8xf32>
    %23 = tpu.matmul %22, %22, %cst_9 {dimension_numbers = #tpu.dot_dimension_numbers<[1], [1], [0], [0], [0, 0, 1, 0], [], []>, precision = #tpu.contract_precision<fp32>} : vector<8x128xf32>, vector<8x128xf32>, vector<8x8xf32> -> vector<8x8xf32>
    %cst_10 = arith.constant 1.000000e+01 : f32
    %24 = vector.broadcast %cst_10 : f32 to vector<8x8xf32>
    %25 = arith.mulf %23, %24 : vector<8x8xf32>
    %cst_11 = arith.constant -3.000000e+01 : f32
    %cst_12 = arith.constant 3.000000e+01 : f32
    %26 = vector.broadcast %cst_11 : f32 to vector<8x8xf32>
    %27 = arith.maximumf %26, %25 : vector<8x8xf32>
    %28 = vector.broadcast %cst_12 : f32 to vector<8x8xf32>
    %29 = arith.minimumf %28, %27 : vector<8x8xf32>
    %30 = vector.broadcast %1 : vector<8x1xi32> to vector<8x8xi32>
    %31 = vector.broadcast %2 : vector<1x8xi32> to vector<8x8xi32>
    %32 = arith.cmpi eq, %30, %31 : vector<8x8xi32>
    %33 = arith.extui %32 : vector<8x8xi1> to vector<8x8xi32>
    %34 = arith.sitofp %33 : vector<8x8xi32> to vector<8x8xf32>
    %35 = tpu.iota {dimensions = array<i32: 0>} : vector<8x8xi32>
    %36 = tpu.iota {dimensions = array<i32: 1>} : vector<8x8xi32>
    %37 = arith.cmpi eq, %35, %36 : vector<8x8xi32>
    %cst_13 = arith.constant 0.000000e+00 : f32
    %38 = vector.broadcast %cst_13 : f32 to vector<8x8xf32>
    %39 = arith.select %37, %38, %34 : vector<8x8xi1>, vector<8x8xf32>
    %40 = math.exp %29 : vector<8x8xf32>
    %cst_14 = arith.constant dense<0.000000e+00> : vector<8xf32>
    %41 = vector.multi_reduction <add>, %40, %cst_14 [1] : vector<8x8xf32> to vector<8xf32>
    %42 = vector.shape_cast %41 : vector<8xf32> to vector<8x1xf32>
    %cst_15 = arith.constant 0.000000e+00 : f32
    %43 = vector.broadcast %cst_15 : f32 to vector<8x8xf32>
    %44 = arith.select %37, %40, %43 : vector<8x8xi1>, vector<8x8xf32>
    %cst_16 = arith.constant dense<0.000000e+00> : vector<8xf32>
    %45 = vector.multi_reduction <add>, %44, %cst_16 [1] : vector<8x8xf32> to vector<8xf32>
    %46 = vector.shape_cast %45 : vector<8xf32> to vector<8x1xf32>
    %47 = arith.subf %42, %46 : vector<8x1xf32>
    %cst_17 = arith.constant 9.99999993E-9 : f32
    %48 = vector.broadcast %cst_17 : f32 to vector<8x1xf32>
    %49 = arith.addf %47, %48 : vector<8x1xf32>
    %50 = math.log %49 : vector<8x1xf32>
    %51 = vector.broadcast %50 : vector<8x1xf32> to vector<8x8xf32>
    %52 = arith.subf %29, %51 : vector<8x8xf32>
    %cst_18 = arith.constant dense<0.000000e+00> : vector<8xf32>
    %53 = vector.multi_reduction <add>, %39, %cst_18 [1] : vector<8x8xf32> to vector<8xf32>
    %54 = vector.shape_cast %53 : vector<8xf32> to vector<8x1xf32>
    %55 = arith.mulf %39, %52 : vector<8x8xf32>
    %cst_19 = arith.constant dense<0.000000e+00> : vector<8xf32>
    %56 = vector.multi_reduction <add>, %55, %cst_19 [1] : vector<8x8xf32> to vector<8xf32>
    %57 = vector.shape_cast %56 : vector<8xf32> to vector<8x1xf32>
    %cst_20 = arith.constant 9.99999993E-9 : f32
    %58 = vector.broadcast %cst_20 : f32 to vector<8x1xf32>
    %59 = arith.addf %54, %58 : vector<8x1xf32>
    %60 = arith.divf %57, %59 : vector<8x1xf32>
    %cst_21 = arith.constant 0.000000e+00 : f32
    %61 = vector.broadcast %cst_21 : f32 to vector<8x1xf32>
    %62 = arith.cmpf ogt, %54, %61 : vector<8x1xf32>
    %63 = arith.extui %62 : vector<8x1xi1> to vector<8x1xi32>
    %64 = arith.sitofp %63 : vector<8x1xi32> to vector<8x1xf32>
    %65 = vector.shape_cast %64 : vector<8x1xf32> to vector<1x8x1xf32>
    %cst_22 = arith.constant dense<0.000000e+00> : vector<1xf32>
    %66 = vector.multi_reduction <add>, %65, %cst_22 [1, 2] : vector<1x8x1xf32> to vector<1xf32>
    %67 = vector.shape_cast %66 : vector<1xf32> to vector<1x1x1xf32>
    %68 = vector.extract %67[0, 0, 0] : f32 from vector<1x1x1xf32>
    %69 = vector.broadcast %68 : f32 to vector<1x1xf32>
    %70 = arith.mulf %64, %60 : vector<8x1xf32>
    %71 = vector.shape_cast %70 : vector<8x1xf32> to vector<1x8x1xf32>
    %cst_23 = arith.constant dense<0.000000e+00> : vector<1xf32>
    %72 = vector.multi_reduction <add>, %71, %cst_23 [1, 2] : vector<1x8x1xf32> to vector<1xf32>
    %73 = vector.shape_cast %72 : vector<1xf32> to vector<1x1x1xf32>
    %74 = vector.extract %73[0, 0, 0] : f32 from vector<1x1x1xf32>
    %75 = vector.broadcast %74 : f32 to vector<1x1xf32>
    %cst_24 = arith.constant 0.000000e+00 : f32
    %76 = vector.broadcast %cst_24 : f32 to vector<1x1xf32>
    %77 = arith.cmpf ogt, %69, %76 : vector<1x1xf32>
    %cst_25 = arith.constant 0.000000e+00 : f32
    %78 = vector.broadcast %cst_25 : f32 to vector<1x1xf32>
    %79 = arith.subf %78, %75 : vector<1x1xf32>
    %cst_26 = arith.constant 1.000000e+00 : f32
    %80 = vector.broadcast %cst_26 : f32 to vector<1x1xf32>
    %81 = arith.maximumf %69, %80 : vector<1x1xf32>
    %82 = arith.divf %79, %81 : vector<1x1xf32>
    %cst_27 = arith.constant 0.000000e+00 : f32
    %83 = vector.broadcast %cst_27 : f32 to vector<1x1xf32>
    %84 = arith.select %77, %82, %83 : vector<1x1xi1>, vector<1x1xf32>
    %cst_28 = arith.constant 5.000000e-01 : f32
    %85 = vector.broadcast %cst_28 : f32 to vector<1x1xf32>
    %86 = arith.cmpf ogt, %12, %85 : vector<1x1xf32>
    %87 = math.absf %84 : vector<1x1xf32>
    %cst_29 = arith.constant 0x7F800000 : f32
    %88 = vector.broadcast %cst_29 : f32 to vector<1x1xf32>
    %89 = arith.cmpf olt, %87, %88 : vector<1x1xf32>
    %90 = arith.andi %86, %89 : vector<1x1xi1>
    %cst_30 = arith.constant 0.000000e+00 : f32
    %91 = vector.broadcast %cst_30 : f32 to vector<1x1xf32>
    %92 = arith.select %90, %84, %91 : vector<1x1xi1>, vector<1x1xf32>
    %c0_31 = arith.constant 0 : index
    %c0_32 = arith.constant 0 : index
    %93 = vector.load %arg3[%c0_31, %c0_32] : memref<1x1xf32, #tpu.memory_space<vmem>>, vector<1x1xf32>
    tpu.vector_store %arg3[%c0_31, %c0_32], %92 {strides = array<i32>} : memref<1x1xf32, #tpu.memory_space<vmem>>, vector<1x1xf32>,
    return
  }
}

</mosaic_0001>

<llo_original>
// kernel: tpu_custom_call.1
$region0: #{tpu_custom_call.1}
  #allocation0 [shape = 'u32[]', space=smem, size = 0x4, offset = 0x4, fixed_abs, tag = 'smem constant byte address 0x4 - core index']
  #allocation1 [shape = 'u32[72,128]{1,0:T(1,128)}', space=vmem, size = 0x9000, scoped, tag = 'internal scratch']
  %s0 = inlined_call_operand.vmem [shape: f32[8,128], index: 0, kind: input, shape index: {}]
  %s1 = inlined_call_operand.vmem [shape: s32[8,1], index: 1, kind: input, shape index: {}]
  %s2 = inlined_call_operand.vmem [shape: s32[1,8], index: 2, kind: input, shape index: {}]
  %s3 = inlined_call_operand.hbm [shape: f32[1,1], index: 3, kind: output, shape index: {}]
  %s4 = sld [smem:[#allocation0]]
  $region22: #{tpu_custom_call.1} parent=0
    _
  %s6 = ssub.s32 1, %s4
  %s7 = scalar_select 0, %s6, %s4
  $region1: #{tpu_custom_call.1} parent=0
    #allocation2 [shape = 'u8[512]{0}', space=vmem, size = 0x400, scoped, tag = 'output window, operand 0, single buffered']
    #allocation3 [shape = 's32[1]{0}', space=sflag, size = 0x4, scoped, tag = 'scoped memory for tpu_custom_call.1']
    %8 = vsyncpa [#allocation3], 0
    // Predicated region
    $region2: #{tpu_custom_call.1} parent=1 // pred_check
      _
    $region3: #{tpu_custom_call.1} parent=1 // pred_check_branch
      %10 = sbr.rel (0) target = $region5
    $region4: #{tpu_custom_call.1} parent=1 // pred_region
      _
    $region5: #{tpu_custom_call.1} parent=1 // pred_fallthru
      _
    // Predicated region
    $region6: #{tpu_custom_call.1} parent=1 // pred_check
      _
    $region7: #{tpu_custom_call.1} parent=1 // pred_check_branch
      %12 = sbr.rel (0) target = $region9
    $region8: #{tpu_custom_call.1} parent=1 // pred_region
      _
    $region9: #{tpu_custom_call.1} parent=1 // pred_fallthru
      _
    // Predicated region
    $region10: #{tpu_custom_call.1} parent=1 // pred_check
      _
    $region11: #{tpu_custom_call.1} parent=1 // pred_check_branch
      %14 = sbr.rel (0) target = $region13
    $region12: #{tpu_custom_call.1} parent=1 // pred_region
      _
    $region13: #{tpu_custom_call.1} parent=1 // pred_fallthru
      _
    %v15 = vld [vmem:[%s0] sm:$0xff]
    %v16 = vld [vmem:[%s1] sm:$0xff]
    %v17 = vld [vmem:[%s2] sm:$0x1]
    %v18 = vand.u32 2147483647, %v15
    %vm19 = vcmp.lt.f32.partialorder %v18, inf
    %v20 = vsel %vm19, 1, 0
    %v21 = vcvt.s32.f32 %v20
    %22 = vmin.xlane.f32.xlu0 %v21
    %v23 = vpop.xlane.xlu0 %22
    %v24 = vrot.slane %v23, 4
    %v25 = vmin.f32 %v23, %v24
    %v26 = vrot.slane %v25, 2
    %v27 = vmin.f32 %v25, %v26
    %v28 = vrot.slane %v27, 1
    %v29 = vmin.f32 %v27, %v28
    %s30 = vtos %v29
    %v31 = vstv %s30
    %v32 = vmul.f32 %v15, %v15
    %33 = vadd.xlane.f32.xlu0 %v32
    %v34 = vpop.xlane.xlu0 %33
    %v35 = vrsqrt.pop %v34
    %v36 = vmul.f32 %v35, %v34
    %v37 = vmul.f32 %v36, %v35
    %v38 = vmul.f32 0.5, %v37
    %v39 = vsub.f32 1.5, %v38
    %v40 = vmul.f32 %v35, %v39
    %v41 = vmul.f32 %v34, %v40
    %vm42 = vcmp.eq.f32.partialorder %v34, inf
    %v43 = vsel %vm42, %v34, %v41
    %vm44 = vcmp.eq.f32.partialorder %v34, 0.0
    %v45 = vand.u32 %v34, 2147483648
    %v46 = vsel %vm44, %v45, %v43
    %v47 = vmax.f32 %v46, 1e-12
    %v48 = vrcp.pop %v47
    %v49 = vmul.f32 %v47, %v48
    %v50 = vsub.f32 1.0, %v49
    %v51 = vmul.f32 %v48, %v50
    %v52 = vadd.f32 %v48, %v51
    %vm53 = vweird.f32 %v47
    %vm54 = vweird.f32 %v48
    %vm55 = vmor %vm53, %vm54
    %v56 = vsel %vm55, %v48, %v52
    %v57 = vand.u32 2147483647, %v47
    %vm58 = vcmp.eq.f32.partialorder %v57, 8.507059e+37
    %v59 = vand.u32 %v47, 2147483648
    %v60 = vor.u32 1.1754944e-38, %v59
    %v61 = vsel %vm58, %v60, %v56
    %v62 = vmul.f32 1.0, %v61
    %v63 = vmul.f32 %v15, %v62
    %64 = vmatpush.xpose.msra.mxu0 0.0
    %65 = vmatpush.xpose.msra.mxu0 0.0
    %66 = vmatpush.xpose.msra.mxu0 0.0
    %67 = vmatpush.xpose.msra.mxu0 0.0
    %68 = vmatpush.xpose.msra.mxu0 0.0
    %69 = vmatpush.xpose.msra.mxu0 0.0
    %70 = vmatpush.xpose.msra.mxu0 0.0
    %71 = vmatpush.xpose.msra.mxu0 0.0
    %72 = vmatpush.xpose.msra.mxu0 0.0
    %73 = vmatpush.xpose.msra.mxu0 0.0
    %74 = vmatpush.xpose.msra.mxu0 0.0
    %75 = vmatpush.xpose.msra.mxu0 0.0
    %76 = vmatpush.xpose.msra.mxu0 0.0
    %77 = vmatpush.xpose.msra.mxu0 0.0
    %78 = vmatpush.xpose.msra.mxu0 0.0
    %v79 = vand.u32 %v63, 4294901760
    %80 = vmatpush.xpose.msra.mxu0 %v79
    %v81 = vand.u32 %v63, 4294901760
    %v82 = vsub.f32 %v63, %v81
    %v83 = vand.u32 %v82, 4294901760
    %v84 = vsub.f32 %v82, %v83
    %v85 = vand.u32 %v84, 4294901760
    %86 = vmatmul.f32.gmra.mxu0 %v85
    %v87 = vpop.f32.mrf.mxu0
    %v88 = vadd.f32 0.0, %v87
    %89 = vdwg.mxu0
    %90 = vmatpush.xpose.msra.mxu0 0.0
    %91 = vmatpush.xpose.msra.mxu0 0.0
    %92 = vmatpush.xpose.msra.mxu0 0.0
    %93 = vmatpush.xpose.msra.mxu0 0.0
    %94 = vmatpush.xpose.msra.mxu0 0.0
    %95 = vmatpush.xpose.msra.mxu0 0.0
    %96 = vmatpush.xpose.msra.mxu0 0.0
    %97 = vmatpush.xpose.msra.mxu0 0.0
    %98 = vmatpush.xpose.msra.mxu0 0.0
    %99 = vmatpush.xpose.msra.mxu0 0.0
    %100 = vmatpush.xpose.msra.mxu0 0.0
    %101 = vmatpush.xpose.msra.mxu0 0.0
    %102 = vmatpush.xpose.msra.mxu0 0.0
    %103 = vmatpush.xpose.msra.mxu0 0.0
    %104 = vmatpush.xpose.msra.mxu0 0.0
    %v105 = vand.u32 %v63, 4294901760
    %v106 = vsub.f32 %v63, %v105
    %v107 = vand.u32 %v106, 4294901760
    %v108 = vsub.f32 %v106, %v107
    %v109 = vand.u32 %v108, 4294901760
    %110 = vmatpush.xpose.msra.mxu0 %v109
    %v111 = vand.u32 %v63, 4294901760
    %112 = vmatmul.f32.gmra.mxu0 %v111
    %v113 = vpop.f32.mrf.mxu0
    %v114 = vadd.f32 %v88, %v113
    %115 = vdwg.mxu0
    %116 = vmatpush.xpose.msra.mxu0 0.0
    %117 = vmatpush.xpose.msra.mxu0 0.0
    %118 = vmatpush.xpose.msra.mxu0 0.0
    %119 = vmatpush.xpose.msra.mxu0 0.0
    %120 = vmatpush.xpose.msra.mxu0 0.0
    %121 = vmatpush.xpose.msra.mxu0 0.0
    %122 = vmatpush.xpose.msra.mxu0 0.0
    %123 = vmatpush.xpose.msra.mxu0 0.0
    %124 = vmatpush.xpose.msra.mxu0 0.0
    %125 = vmatpush.xpose.msra.mxu0 0.0
    %126 = vmatpush.xpose.msra.mxu0 0.0
    %127 = vmatpush.xpose.msra.mxu0 0.0
    %128 = vmatpush.xpose.msra.mxu0 0.0
    %129 = vmatpush.xpose.msra.mxu0 0.0
    %130 = vmatpush.xpose.msra.mxu0 0.0
    %v131 = vand.u32 %v63, 4294901760
    %v132 = vsub.f32 %v63, %v131
    %133 = vmatpush.xpose.msra.mxu0 %v132
    %v134 = vand.u32 %v63, 4294901760
    %v135 = vsub.f32 %v63, %v134
    %136 = vmatmul.f32.gmra.mxu0 %v135
    %v137 = vpop.f32.mrf.mxu0
    %v138 = vadd.f32 %v114, %v137
    %139 = vdwg.mxu0
    %140 = vmatpush.xpose.msra.mxu0 0.0
    %141 = vmatpush.xpose.msra.mxu0 0.0
    %142 = vmatpush.xpose.msra.mxu0 0.0
    %143 = vmatpush.xpose.msra.mxu0 0.0
    %144 = vmatpush.xpose.msra.mxu0 0.0
    %145 = vmatpush.xpose.msra.mxu0 0.0
    %146 = vmatpush.xpose.msra.mxu0 0.0
    %147 = vmatpush.xpose.msra.mxu0 0.0
    %148 = vmatpush.xpose.msra.mxu0 0.0
    %149 = vmatpush.xpose.msra.mxu0 0.0
    %150 = vmatpush.xpose.msra.mxu0 0.0
    %151 = vmatpush.xpose.msra.mxu0 0.0
    %152 = vmatpush.xpose.msra.mxu0 0.0
    %153 = vmatpush.xpose.msra.mxu0 0.0
    %154 = vmatpush.xpose.msra.mxu0 0.0
    %v155 = vand.u32 %v63, 4294901760
    %156 = vmatpush.xpose.msra.mxu0 %v155
    %v157 = vand.u32 %v63, 4294901760
    %v158 = vsub.f32 %v63, %v157
    %v159 = vand.u32 %v158, 4294901760
    %160 = vmatmul.f32.gmra.mxu0 %v159
    %v161 = vpop.f32.mrf.mxu0
    %v162 = vadd.f32 %v138, %v161
    %163 = vdwg.mxu0
    %164 = vmatpush.xpose.msra.mxu0 0.0
    %165 = vmatpush.xpose.msra.mxu0 0.0
    %166 = vmatpush.xpose.msra.mxu0 0.0
    %167 = vmatpush.xpose.msra.mxu0 0.0
    %168 = vmatpush.xpose.msra.mxu0 0.0
    %169 = vmatpush.xpose.msra.mxu0 0.0
    %170 = vmatpush.xpose.msra.mxu0 0.0
    %171 = vmatpush.xpose.msra.mxu0 0.0
    %172 = vmatpush.xpose.msra.mxu0 0.0
    %173 = vmatpush.xpose.msra.mxu0 0.0
    %174 = vmatpush.xpose.msra.mxu0 0.0
    %175 = vmatpush.xpose.msra.mxu0 0.0
    %176 = vmatpush.xpose.msra.mxu0 0.0
    %177 = vmatpush.xpose.msra.mxu0 0.0
    %178 = vmatpush.xpose.msra.mxu0 0.0
    %v179 = vand.u32 %v63, 4294901760
    %v180 = vsub.f32 %v63, %v179
    %v181 = vand.u32 %v180, 4294901760
    %182 = vmatpush.xpose.msra.mxu0 %v181
    %v183 = vand.u32 %v63, 4294901760
    %184 = vmatmul.f32.gmra.mxu0 %v183
    %v185 = vpop.f32.mrf.mxu0
    %v186 = vadd.f32 %v162, %v185
    %187 = vdwg.mxu0
    %188 = vmatpush.xpose.msra.mxu0 0.0
    %189 = vmatpush.xpose.msra.mxu0 0.0
    %190 = vmatpush.xpose.msra.mxu0 0.0
    %191 = vmatpush.xpose.msra.mxu0 0.0
    %192 = vmatpush.xpose.msra.mxu0 0.0
    %193 = vmatpush.xpose.msra.mxu0 0.0
    %194 = vmatpush.xpose.msra.mxu0 0.0
    %195 = vmatpush.xpose.msra.mxu0 0.0
    %196 = vmatpush.xpose.msra.mxu0 0.0
    %197 = vmatpush.xpose.msra.mxu0 0.0
    %198 = vmatpush.xpose.msra.mxu0 0.0
    %199 = vmatpush.xpose.msra.mxu0 0.0
    %200 = vmatpush.xpose.msra.mxu0 0.0
    %201 = vmatpush.xpose.msra.mxu0 0.0
    %202 = vmatpush.xpose.msra.mxu0 0.0
    %v203 = vand.u32 %v63, 4294901760
    %204 = vmatpush.xpose.msra.mxu0 %v203
    %v205 = vand.u32 %v63, 4294901760
    %206 = vmatmul.f32.gmra.mxu0 %v205
    %v207 = vpop.f32.mrf.mxu0
    %v208 = vadd.f32 %v186, %v207
    %209 = vdwg.mxu0
    %v210 = vmul.f32 %v208, 10.0
    %v211 = vmax.f32 %v210, -30.0
    %v212 = vmin.f32 %v211, 30.0
    %213 = vset.pattern.permute.xlu0 0
    %214 = vperm.xlu0 %213, %v16
    %v215 = vpop.permute.xlu0 %214
    %v216 = vperm.slane %v17, 0
    %vm217 = vcmp.eq.s32.totalorder %v215, %v216
    %v218 = vsel %vm217, 1, 0
    %v219 = vcvt.s32.f32 %v218
    %v220 = vlaneseq
    %v221 = vshrl.u32 %v220, 7
    %v222 = vlaneseq
    %v223 = vand.u32 %v222, 127
    %vm224 = vcmp.eq.s32.totalorder %v221, %v223
    %v225 = vsel %vm224, 0.0, %v219
    %v226 = vmul.f32 %v212, 1.442695
    %v227 = vpow.pop %v226
    %vm228 = vcmask 64512
    %v229 = vsel %vm228, %v227, 0.0
    %230 = vadd.xlane.f32.xlu0 %v229
    %v231 = vpop.xlane.xlu0 %230
    %v232 = vsel %vm224, %v227, 0.0
    %v233 = vsel %vm228, %v232, 0.0
    %234 = vadd.xlane.f32.xlu0 %v233
    %v235 = vpop.xlane.xlu0 %234
    %v236 = vsub.f32 %v231, %v235
    %v237 = vadd.f32 %v236, 1e-08
    %v238 = vlog2.pop %v237
    %v239 = vmul.f32 %v238, 0.6931472
    %v240 = vsub.f32 %v212, %v239
    %v241 = vsel %vm228, %v225, 0.0
    %242 = vadd.xlane.f32.xlu0 %v241
    %v243 = vpop.xlane.xlu0 %242
    %v244 = vmul.f32 %v225, %v240
    %v245 = vsel %vm228, %v244, 0.0
    %246 = vadd.xlane.f32.xlu0 %v245
    %v247 = vpop.xlane.xlu0 %246
    %v248 = vadd.f32 %v243, 1e-08
    %v249 = vrcp.pop %v248
    %v250 = vmul.f32 %v248, %v249
    %v251 = vsub.f32 1.0, %v250
    %v252 = vmul.f32 %v249, %v251
    %v253 = vadd.f32 %v249, %v252
    %vm254 = vweird.f32 %v248
    %vm255 = vweird.f32 %v249
    %vm256 = vmor %vm254, %vm255
    %v257 = vsel %vm256, %v249, %v253
    %v258 = vand.u32 2147483647, %v248
    %vm259 = vcmp.eq.f32.partialorder %v258, 8.507059e+37
    %v260 = vand.u32 %v248, 2147483648
    %v261 = vor.u32 1.1754944e-38, %v260
    %v262 = vsel %vm259, %v261, %v257
    %v263 = vmul.f32 %v247, %v262
    %vm264 = vcmp.gt.f32.partialorder %v243, 0.0
    %v265 = vsel %vm264, 1, 0
    %v266 = vcvt.s32.f32 %v265
    %vm267 = vcmask 7168
    %v268 = vsel %vm267, %v266, 0.0
    %269 = vadd.xlane.f32.xlu0 %v268
    %v270 = vpop.xlane.xlu0 %269
    %v271 = vrot.slane %v270, 4
    %v272 = vadd.f32 %v270, %v271
    %v273 = vrot.slane %v272, 2
    %v274 = vadd.f32 %v272, %v273
    %v275 = vrot.slane %v274, 1
    %v276 = vadd.f32 %v274, %v275
    %s277 = vtos %v276
    %v278 = vstv %s277
    %v279 = vmul.f32 %v266, %v263
    %v280 = vsel %vm267, %v279, 0.0
    %281 = vadd.xlane.f32.xlu0 %v280
    %v282 = vpop.xlane.xlu0 %281
    %v283 = vrot.slane %v282, 4
    %v284 = vadd.f32 %v282, %v283
    %v285 = vrot.slane %v284, 2
    %v286 = vadd.f32 %v284, %v285
    %v287 = vrot.slane %v286, 1
    %v288 = vadd.f32 %v286, %v287
    %s289 = vtos %v288
    %v290 = vstv %s289
    %vm291 = vcmp.gt.f32.partialorder %v278, 0.0
    %v292 = vsub.f32 0.0, %v290
    %v293 = vmax.f32 %v278, 1.0
    %v294 = vrcp.pop %v293
    %v295 = vmul.f32 %v293, %v294
    %v296 = vsub.f32 1.0, %v295
    %v297 = vmul.f32 %v294, %v296
    %v298 = vadd.f32 %v294, %v297
    %vm299 = vweird.f32 %v293
    %vm300 = vweird.f32 %v294
    %vm301 = vmor %vm299, %vm300
    %v302 = vsel %vm301, %v294, %v298
    %v303 = vand.u32 2147483647, %v293
    %vm304 = vcmp.eq.f32.partialorder %v303, 8.507059e+37
    %v305 = vand.u32 %v293, 2147483648
    %v306 = vor.u32 1.1754944e-38, %v305
    %v307 = vsel %vm304, %v306, %v302
    %v308 = vmul.f32 %v292, %v307
    %v309 = vsel %vm291, %v308, 0.0
    %vm310 = vcmp.gt.f32.partialorder %v31, 0.5
    %v311 = vand.u32 2147483647, %v309
    %vm312 = vcmp.lt.f32.partialorder %v311, inf
    %vm313 = vmand %vm310, %vm312
    %v314 = vsel %vm313, %v309, 0.0
    %vm315 = vcmask 0
    %316 = vst.msk [vmem:[#allocation2] sm:$0x1] %vm315, %v314
    // Predicated region
    $region14: #{tpu_custom_call.1} parent=1 // pred_check
      _
    $region15: #{tpu_custom_call.1} parent=1 // pred_check_branch
      %318 = sbr.rel (0) target = $region17
    $region16: #{tpu_custom_call.1} parent=1 // pred_region
      %320 = vsyncadd [#allocation3], 0
      %s322 = sshll.u32 [#allocation2], 4
      %s323 = int_to_ptr.vmem [resolvable:$true] %s322
      %s324 = sshll.u32 %s3, 4
      %s325 = int_to_ptr.hbm [resolvable:$true] %s324
      %327 = dma.vmem_to_hbm [thread:$0]  %s323, 16, %s325, [#allocation3]
    $region17: #{tpu_custom_call.1} parent=1 // pred_fallthru
      _
    // Predicated region
    $region18: #{tpu_custom_call.1} parent=1 // pred_check
      _
    $region19: #{tpu_custom_call.1} parent=1 // pred_check_branch
      %329 = sbr.rel (0) target = $region21
    $region20: #{tpu_custom_call.1} parent=1 // pred_region
      %331 = dma.done [#allocation3], 16
    $region21: #{tpu_custom_call.1} parent=1 // pred_fallthru
      _
    %332 = vsyncpa [#allocation3], 1

</llo_original>
